<compile_context>
chip_gen: v7x
topology: tpu7x:2x2x1
jax: 0.10.0
libtpu: 0.0.40
codegen_flags: <defaults>
</compile_context>

<pallas_src>
import functools

import jax
import jax.numpy as jnp
from jax.experimental import pallas as pl
from jax.experimental.pallas import tpu as pltpu


def _label_smoothing_kernel(x_ref, t_ref, out_ref, *, num_classes, smoothing,
                            n_valid, tn):
    confidence = 1.0 - smoothing
    off_value = smoothing / (num_classes - 1)

    x = x_ref[...].astype(jnp.float32)        # (TN, C); bf16 inputs upcast here
    t = t_ref[...]                            # (TN, 1) int32 targets

    # Row-wise log-softmax pieces, everything derived from z = x - m so x's
    # live range ends immediately after the subtraction.
    m = jnp.max(x, axis=-1, keepdims=True)                            # (TN, 1)
    z = x - m
    lse = jnp.log(jnp.sum(jnp.exp(z), axis=-1, keepdims=True))        # (TN, 1)
    sum_z = jnp.sum(z, axis=-1, keepdims=True)                        # (TN, 1)

    # log_prob at the target class via a single masked reduce (no scatter).
    col = jax.lax.broadcasted_iota(jnp.int32, z.shape, 1)             # (TN, C)
    z_at_t = jnp.sum(jnp.where(col == t, z, 0.0), axis=-1, keepdims=True)

    logp_at_t = z_at_t - lse                                          # (TN, 1)
    sum_logp = sum_z - jnp.float32(num_classes) * lse                 # (TN, 1)

    # Smoothed cross entropy per row; true_dist is never materialized:
    #   loss = -[(conf - off) * logp[target] + off * sum_c logp[c]]
    per_row = -((confidence - off_value) * logp_at_t + off_value * sum_logp)

    # Select (not multiply) masks rows past the true batch size in the
    # (possibly partial) last block, so garbage/NaN logits cannot leak.
    row = (pl.program_id(0) * tn
           + jax.lax.broadcasted_iota(jnp.int32, per_row.shape, 0))   # (TN, 1)
    per_row = jnp.where(row < n_valid, per_row, 0.0)

    out_ref[...] = per_row


def _vmem_capacity_bytes():
    try:
        info = pltpu.get_tpu_info()
        return int(getattr(info, "vmem_capacity_bytes", 128 * 1024 * 1024))
    except Exception:
        return 128 * 1024 * 1024   # assume v5e/v6e-class if the query fails


def _pick_tile(n, c, vmem_cap_bytes):
    """Batch tile sized by block bytes (f32-equivalent), VMEM-generation aware."""
    if vmem_cap_bytes <= 96 * 1024 * 1024:        # v7x: 64 MiB VMEM per TC
        budget_bytes, tn_cap = 2 * 1024 * 1024, 1024
    else:                                         # v5e / v6e: 128 MiB VMEM
        budget_bytes, tn_cap = 4 * 1024 * 1024, 2048
    target_elems = budget_bytes // 4              # f32-equiv elements per buffer
    tn = max(16, (target_elems // max(c, 1)) // 16 * 16)   # 16-row granularity
    tn = min(tn, tn_cap)
    if n >= 32:
        # Guarantee >= 2 grid blocks so the "parallel" axis feeds both v7x TCs.
        tn = min(tn, ((n // 2 + 15) // 16) * 16)
    if tn >= n:
        return n                                  # one full block (dims == array)
    return tn


def label_smoothing_loss(inputs, targets, num_classes, smoothing=0.1):
    """inputs: [N, C] float logits (any float dtype); targets: [N] int indices."""
    n, c = inputs.shape
    assert c == num_classes
    assert num_classes > 1, "label smoothing requires num_classes > 1"

    vmem_cap = _vmem_capacity_bytes()
    tn = _pick_tile(n, c, vmem_cap)
    grid_n = pl.cdiv(n, tn)

    # Targets as a (N, 1) int32 column block; no padding (partial blocks OK).
    targets2d = targets.astype(jnp.int32).reshape(n, 1)

    kernel = functools.partial(
        _label_smoothing_kernel,
        num_classes=num_classes,
        smoothing=float(smoothing),
        n_valid=n,
        tn=tn,
    )

    itemsize = inputs.dtype.itemsize
    cost = pl.CostEstimate(
        flops=5 * n * c,
        transcendentals=n * c + n,
        bytes_accessed=n * c * itemsize + n * 4 + n * 4,
    )

    vmem_limit = (40 * 1024 * 1024 if vmem_cap <= 96 * 1024 * 1024
                  else 48 * 1024 * 1024)

    per_row = pl.pallas_call(
        kernel,
        out_shape=jax.ShapeDtypeStruct((n, 1), jnp.float32),
        grid=(grid_n,),
        in_specs=[
            pl.BlockSpec((tn, c), lambda i: (i, 0)),   # logits tile (native dtype)
            pl.BlockSpec((tn, 1), lambda i: (i, 0)),   # targets tile
        ],
        out_specs=pl.BlockSpec((tn, 1), lambda i: (i, 0)),
        compiler_params=pltpu.CompilerParams(
            dimension_semantics=("parallel",),
            vmem_limit_bytes=vmem_limit,
        ),
        cost_estimate=cost,
    )(inputs, targets2d)

    # Tiny final reduction of per-row partials; divide by the true N.
    return jnp.sum(per_row) / jnp.float32(n)


def _reference(logits, targets, num_classes, smoothing):
    logp = jax.nn.log_softmax(logits.astype(jnp.float32), axis=-1)
    n = logits.shape[0]
    true_dist = jnp.full((n, num_classes), smoothing / (num_classes - 1),
                         dtype=jnp.float32)
    true_dist = true_dist.at[jnp.arange(n), targets].set(1.0 - smoothing)
    return jnp.mean(jnp.sum(-true_dist * logp, axis=-1))


if __name__ == "__main__":
    num_classes = 32
    smoothing = 0.1

    # Small exact-block case.
    key = jax.random.PRNGKey(0)
    kx, kt = jax.random.split(key)
    n1 = 8
    logits1 = jax.random.normal(kx, (n1, num_classes), dtype=jnp.float32)
    targets1 = jax.random.randint(kt, (n1,), 0, num_classes, dtype=jnp.int32)
    loss1 = jax.block_until_ready(
        label_smoothing_loss(logits1, targets1, num_classes, smoothing))
    ref1 = _reference(logits1, targets1, num_classes, smoothing)
    assert jnp.allclose(loss1, ref1, atol=1e-5, rtol=1e-5), (loss1, ref1)

    # Ragged batch -> multi-block grid + partial (masked) last block, no padding.
    n2 = 50
    kx2, kt2 = jax.random.split(jax.random.PRNGKey(1))
    logits2 = jax.random.normal(kx2, (n2, num_classes), dtype=jnp.float32)
    targets2 = jax.random.randint(kt2, (n2,), 0, num_classes, dtype=jnp.int32)
    loss2 = jax.block_until_ready(
        label_smoothing_loss(logits2, targets2, num_classes, smoothing))
    ref2 = _reference(logits2, targets2, num_classes, smoothing)
    assert jnp.allclose(loss2, ref2, atol=1e-5, rtol=1e-5), (loss2, ref2)

    # bf16 logits stay bf16 through the DMA; kernel upcasts to f32 internally.
    logits3 = logits2.astype(jnp.bfloat16)
    loss3 = jax.block_until_ready(
        label_smoothing_loss(logits3, targets2, num_classes, smoothing))
    ref3 = _reference(logits3.astype(jnp.float32), targets2, num_classes, smoothing)
    assert jnp.allclose(loss3, ref3, atol=1e-4, rtol=1e-4), (loss3, ref3)

    print("KERNEL_OK")
</pallas_src>

<mosaic_0001>
module attributes {stable_mosaic.version = 11 : i64} {
  func.func @_label_smoothing_kernel(%arg0: i32, %arg1: memref<8x32xf32, #tpu.memory_space<vmem>>, %arg2: memref<8x1xi32, #tpu.memory_space<vmem>>, %arg3: memref<8x1xf32, #tpu.memory_space<vmem>>) attributes {dimension_semantics = [#tpu.dimension_semantics<parallel>], iteration_bounds = array<i64: 1>, scalar_prefetch = 0 : i64, scratch_operands = 0 : i64, tpu.core_type = #tpu.core_type<tc>, window_params = [{transform_indices = @transform_0, window_bounds = array<i64: 8, 32>}, {transform_indices = @transform_1, window_bounds = array<i64: 8, 1>}, {transform_indices = @transform_2, window_bounds = array<i64: 8, 1>}]} {
    %c0 = arith.constant 0 : index
    %c0_0 = arith.constant 0 : index
    %0 = vector.load %arg1[%c0, %c0_0] : memref<8x32xf32, #tpu.memory_space<vmem>>, vector<8x32xf32>
    %c0_1 = arith.constant 0 : index
    %c0_2 = arith.constant 0 : index
    %1 = vector.load %arg2[%c0_1, %c0_2] : memref<8x1xi32, #tpu.memory_space<vmem>>, vector<8x1xi32>
    %cst = arith.constant dense<0xFF800000> : vector<8xf32>
    %2 = vector.multi_reduction <maximumf>, %0, %cst [1] : vector<8x32xf32> to vector<8xf32>
    %3 = vector.shape_cast %2 : vector<8xf32> to vector<8x1xf32>
    %4 = vector.broadcast %3 : vector<8x1xf32> to vector<8x32xf32>
    %5 = arith.subf %0, %4 : vector<8x32xf32>
    %6 = math.exp %5 : vector<8x32xf32>
    %cst_3 = arith.constant dense<0.000000e+00> : vector<8xf32>
    %7 = vector.multi_reduction <add>, %6, %cst_3 [1] : vector<8x32xf32> to vector<8xf32>
    %8 = vector.shape_cast %7 : vector<8xf32> to vector<8x1xf32>
    %9 = math.log %8 : vector<8x1xf32>
    %cst_4 = arith.constant dense<0.000000e+00> : vector<8xf32>
    %10 = vector.multi_reduction <add>, %5, %cst_4 [1] : vector<8x32xf32> to vector<8xf32>
    %11 = vector.shape_cast %10 : vector<8xf32> to vector<8x1xf32>
    %12 = tpu.iota {dimensions = array<i32: 1>} : vector<8x32xi32>
    %13 = vector.broadcast %1 : vector<8x1xi32> to vector<8x32xi32>
    %14 = arith.cmpi eq, %12, %13 : vector<8x32xi32>
    %cst_5 = arith.constant 0.000000e+00 : f32
    %15 = vector.broadcast %cst_5 : f32 to vector<8x32xf32>
    %16 = arith.select %14, %5, %15 : vector<8x32xi1>, vector<8x32xf32>
    %cst_6 = arith.constant dense<0.000000e+00> : vector<8xf32>
    %17 = vector.multi_reduction <add>, %16, %cst_6 [1] : vector<8x32xf32> to vector<8xf32>
    %18 = vector.shape_cast %17 : vector<8xf32> to vector<8x1xf32>
    %19 = arith.subf %18, %9 : vector<8x1xf32>
    %cst_7 = arith.constant 3.200000e+01 : f32
    %20 = vector.broadcast %cst_7 : f32 to vector<8x1xf32>
    %21 = arith.mulf %20, %9 : vector<8x1xf32>
    %22 = arith.subf %11, %21 : vector<8x1xf32>
    %cst_8 = arith.constant 0.896774172 : f32
    %23 = vector.broadcast %cst_8 : f32 to vector<8x1xf32>
    %24 = arith.mulf %23, %19 : vector<8x1xf32>
    %cst_9 = arith.constant 0.0032258064 : f32
    %25 = vector.broadcast %cst_9 : f32 to vector<8x1xf32>
    %26 = arith.mulf %25, %22 : vector<8x1xf32>
    %27 = arith.addf %24, %26 : vector<8x1xf32>
    %cst_10 = arith.constant 0.000000e+00 : f32
    %28 = vector.broadcast %cst_10 : f32 to vector<8x1xf32>
    %29 = arith.subf %28, %27 : vector<8x1xf32>
    %c8_i32 = arith.constant 8 : i32
    %30 = arith.muli %arg0, %c8_i32 : i32
    %31 = tpu.iota {dimensions = array<i32: 0>} : vector<8x1xi32>
    %32 = vector.broadcast %30 : i32 to vector<8x1xi32>
    %33 = arith.addi %32, %31 : vector<8x1xi32>
    %c8_i32_11 = arith.constant 8 : i32
    %34 = vector.broadcast %c8_i32_11 : i32 to vector<8x1xi32>
    %35 = arith.cmpi slt, %33, %34 : vector<8x1xi32>
    %cst_12 = arith.constant 0.000000e+00 : f32
    %36 = vector.broadcast %cst_12 : f32 to vector<8x1xf32>
    %37 = arith.select %35, %29, %36 : vector<8x1xi1>, vector<8x1xf32>
    %c0_13 = arith.constant 0 : index
    %c0_14 = arith.constant 0 : index
    %38 = vector.load %arg3[%c0_13, %c0_14] : memref<8x1xf32, #tpu.memory_space<vmem>>, vector<8x1xf32>
    tpu.vector_store %arg3[%c0_13, %c0_14], %37 {strides = array<i32>} : memref<8x1xf32, #tpu.memory_space<vmem>>, vector<8x1xf32>,
    return
  }
  func.func @transform_0(%arg0: i32) -> (i32, i32) {
    %c0_i32 = arith.constant 0 : i32
    %c0_i32_0 = arith.constant 0 : i32
    return %arg0, %c0_i32 : i32, i32
  }
  func.func @transform_1(%arg0: i32) -> (i32, i32) {
    %c0_i32 = arith.constant 0 : i32
    %c0_i32_0 = arith.constant 0 : i32
    return %arg0, %c0_i32 : i32, i32
  }
  func.func @transform_2(%arg0: i32) -> (i32, i32) {
    %c0_i32 = arith.constant 0 : i32
    %c0_i32_0 = arith.constant 0 : i32
    return %arg0, %c0_i32 : i32, i32
  }
}

</mosaic_0001>

<llo_original>
// kernel: tpu_custom_call.1
$region0: #{tpu_custom_call.1}
  #allocation0 [shape = 'u32[]', space=smem, size = 0x4, offset = 0x4, fixed_abs, tag = 'smem constant byte address 0x4 - core index']
  #allocation1 [shape = 'u32[144,128]{1,0:T(1,128)}', space=vmem, size = 0x12000, scoped, tag = 'internal scratch']
  %s0 = inlined_call_operand.vmem [shape: f32[8,32], index: 0, kind: input, shape index: {}]
  %s1 = inlined_call_operand.vmem [shape: s32[8,1], index: 1, kind: input, shape index: {}]
  %s2 = inlined_call_operand.vmem [shape: f32[8,1], index: 2, kind: output, shape index: {}]
  %s3 = sld [smem:[#allocation0]]
  $region18: #{tpu_custom_call.1} parent=0
    _
  %s5 = ssub.s32 1, %s3
  %s6 = scalar_select 0, %s5, %s3
  // Predicated region
  $region2: #{tpu_custom_call.1} parent=0 // pred_check
    _
  $region3: #{tpu_custom_call.1} parent=0 // pred_check_branch
    %8 = sbr.rel (0) target = $region5
  $region4: #{tpu_custom_call.1} parent=0 // pred_region
    _
  $region5: #{tpu_custom_call.1} parent=0 // pred_fallthru
    _
  // Predicated region
  $region6: #{tpu_custom_call.1} parent=0 // pred_check
    _
  $region7: #{tpu_custom_call.1} parent=0 // pred_check_branch
    %10 = sbr.rel (0) target = $region9
  $region8: #{tpu_custom_call.1} parent=0 // pred_region
    _
  $region9: #{tpu_custom_call.1} parent=0 // pred_fallthru
    _
  %v11 = vld [vmem:[%s0] sm:$0xff]
  %v12 = vld [vmem:[%s1] sm:$0xff]
  %vm13 = vcmask 261120
  %v14 = vsel %vm13, %v11, -inf
  %15 = vmax.xlane.f32.xlu0 %v14
  %v16 = vpop.xlane.xlu0 %15
  %v17 = vsub.f32 %v11, %v16
  %v18 = vmul.f32 %v17, 1.442695
  %v19 = vpow.pop %v18
  %v20 = vsel %vm13, %v19, 0.0
  %21 = vadd.xlane.f32.xlu0 %v20
  %v22 = vpop.xlane.xlu0 %21
  %v23 = vlog2.pop %v22
  %v24 = vmul.f32 %v23, 0.6931472
  %v25 = vsel %vm13, %v17, 0.0
  %26 = vadd.xlane.f32.xlu0 %v25
  %v27 = vpop.xlane.xlu0 %26
  %v28 = vlaneseq
  %v29 = vand.u32 %v28, 127
  %30 = vset.pattern.permute.xlu0 0
  %31 = vperm.xlu0 %30, %v12
  %v32 = vpop.permute.xlu0 %31
  %vm33 = vcmp.eq.s32.totalorder %v29, %v32
  %v34 = vsel %vm33, %v17, 0.0
  %v35 = vsel %vm13, %v34, 0.0
  %36 = vadd.xlane.f32.xlu0 %v35
  %v37 = vpop.xlane.xlu0 %36
  %v38 = vsub.f32 %v37, %v24
  %v39 = vmul.f32 %v24, 32.0
  %v40 = vsub.f32 %v27, %v39
  %v41 = vmul.f32 %v38, 0.8967742
  %v42 = vmul.f32 %v40, 0.0032258064
  %v43 = vadd.f32 %v41, %v42
  %v44 = vsub.f32 0.0, %v43
  %s45 = smul.u32 0, 8
  %v46 = vlaneseq
  %v47 = vshrl.u32 %v46, 7
  %v48 = vstv %s45
  %v49 = vadd.s32 %v48, %v47
  %vm50 = vcmp.lt.s32.totalorder %v49, 8
  %v51 = vsel %vm50, %v44, 0.0
  %vm52 = vcmask 7168
  %53 = vst.msk [vmem:[%s2] sm:$0xff] %vm52, %v51
  // Predicated region
  $region10: #{tpu_custom_call.1} parent=0 // pred_check
    _
  $region11: #{tpu_custom_call.1} parent=0 // pred_check_branch
    %55 = sbr.rel (0) target = $region13
  $region12: #{tpu_custom_call.1} parent=0 // pred_region
    _
  $region13: #{tpu_custom_call.1} parent=0 // pred_fallthru
    _
  // Predicated region
  $region14: #{tpu_custom_call.1} parent=0 // pred_check
    _
  $region15: #{tpu_custom_call.1} parent=0 // pred_check_branch
    %57 = sbr.rel (0) target = $region17
  $region16: #{tpu_custom_call.1} parent=0 // pred_region
    _
  $region17: #{tpu_custom_call.1} parent=0 // pred_fallthru
    _

</llo_original>
